<compile_context>
chip_gen: v7x
topology: tpu7x:2x2x1
jax: 0.10.0
libtpu: 0.0.40
codegen_flags: <defaults>
</compile_context>

<pallas_src>
import functools

import jax
import jax.numpy as jnp
from jax.experimental import pallas as pl
from jax.experimental.pallas import tpu as pltpu


def _hbm_copy_kernel(src_ref, dst_ref, sem):
    # Single HBM->HBM DMA of the whole array: pure DMA-engine work at HBM
    # roofline, no VMEM round-trip and no grid-step overhead.
    cp = pltpu.make_async_copy(src_ref, dst_ref, sem)
    cp.start()
    cp.wait()


@functools.lru_cache(maxsize=None)
def _build_copy_fn(shape: tuple, dtype_name: str):
    """Build (once per shape/dtype) a jitted HBM->HBM copy pallas_call."""
    dtype = jnp.dtype(dtype_name)
    copy = pl.pallas_call(
        _hbm_copy_kernel,
        out_shape=jax.ShapeDtypeStruct(shape, dtype),
        in_specs=[pl.BlockSpec(memory_space=pl.ANY)],   # raw HBM ref, no auto-DMA
        out_specs=pl.BlockSpec(memory_space=pl.ANY),    # raw HBM ref, DMA'd manually
        scratch_shapes=[pltpu.SemaphoreType.DMA],
    )
    # jit wrapper is created once here (cached), never per invocation.
    return jax.jit(copy)


def bev_query_generator_forward(bev_queries: jax.Array, *, copy: bool = False) -> jax.Array:
    """Pallas equivalent of BEVQueryGenerator.forward().

    Args:
      bev_queries: (bev_h * bev_w, embed_dim) parameter array.
      copy: if False (default), forward() is a pure identity so the parameter
        is returned directly — zero HBM traffic. If True, a fresh buffer is
        produced via a single HBM->HBM DMA kernel (useful when a downstream
        consumer must not alias the parameter).

    Returns:
      Array identical to `bev_queries`.
    """
    if not copy:
        # Short-circuit: forward() is the identity. Launching any kernel here
        # would only add HBM traffic and dispatch overhead.
        return bev_queries

    fn = _build_copy_fn(tuple(bev_queries.shape), jnp.dtype(bev_queries.dtype).name)
    return fn(bev_queries)


class BEVQueryGeneratorPallas:
    """JAX/Pallas port of the PyTorch BEVQueryGenerator module."""

    def __init__(self, bev_h: int, bev_w: int, embed_dim: int, key: jax.Array):
        self.bev_h = bev_h
        self.bev_w = bev_w
        self.embed_dim = embed_dim
        # Deterministic stand-in for torch.randn(bev_h * bev_w, embed_dim).
        self.bev_queries = jax.random.normal(
            key, (bev_h * bev_w, embed_dim), dtype=jnp.float32
        )

    def __call__(self, *, copy: bool = False):
        return bev_query_generator_forward(self.bev_queries, copy=copy)


if __name__ == "__main__":
    key = jax.random.PRNGKey(0)

    # Small shapes consistent with the module: bev_h=8, bev_w=8, embed_dim=32
    # -> bev_queries of shape (64, 32).
    bev_h, bev_w, embed_dim = 8, 8, 32
    module = BEVQueryGeneratorPallas(bev_h, bev_w, embed_dim, key)

    # Default (recommended) path: exact identity, no kernel launched.
    out_identity = module()
    assert out_identity is module.bev_queries

    # Kernel path: fresh buffer via a single HBM->HBM DMA.
    out_copy = jax.block_until_ready(module(copy=True))
    assert out_copy.shape == (bev_h * bev_w, embed_dim)
    assert out_copy.dtype == jnp.float32
    assert bool(jnp.array_equal(out_copy, module.bev_queries))

    # Second call with the same shape/dtype reuses the cached compiled kernel.
    out_copy2 = jax.block_until_ready(module(copy=True))
    assert bool(jnp.array_equal(out_copy2, module.bev_queries))

    # A lane-aligned shape exercises a second cache entry.
    q2 = jax.random.normal(jax.random.PRNGKey(0), (256, 128), dtype=jnp.float32)
    out2 = jax.block_until_ready(bev_query_generator_forward(q2, copy=True))
    assert bool(jnp.array_equal(out2, q2))

    print("KERNEL_OK")
</pallas_src>

<mosaic_0001>
module attributes {stable_mosaic.version = 11 : i64} {
  func.func @_hbm_copy_kernel(%arg0: memref<64x32xf32, #tpu.memory_space<any>>, %arg1: memref<64x32xf32, #tpu.memory_space<any>>, %arg2: memref<!tpu.dma_semaphore, #tpu.memory_space<semaphore_mem>>) attributes {dimension_semantics = [], scalar_prefetch = 0 : i64, scratch_operands = 1 : i64, tpu.core_type = #tpu.core_type<tc>} {
    tpu.enqueue_dma source(%arg0 : memref<64x32xf32, #tpu.memory_space<any>>) target(%arg1 : memref<64x32xf32, #tpu.memory_space<any>>) target_semaphore(%arg2 : memref<!tpu.dma_semaphore, #tpu.memory_space<semaphore_mem>>)
    tpu.wait_dma2 semaphore(%arg2 : memref<!tpu.dma_semaphore, #tpu.memory_space<semaphore_mem>>) src(%arg0 : memref<64x32xf32, #tpu.memory_space<any>>) dst(%arg1 : memref<64x32xf32, #tpu.memory_space<any>>)
    return
  }
}

</mosaic_0001>

<llo_original>
// kernel: tpu_custom_call.1
$region0: #{tpu_custom_call.1}
  #allocation0 [shape = 'u32[]', space=smem, size = 0x4, offset = 0x4, fixed_abs, tag = 'smem constant byte address 0x4 - core index']
  #allocation1 [shape = 'u32[144,128]{1,0:T(1,128)}', space=vmem, size = 0x12000, scoped, tag = 'internal scratch']
  #allocation2 [shape = 's32[1]{0}', space=sflag, size = 0x4, scoped, tag = 'scratch operand']
  #allocation3 [shape = 's32[]', space=sflag, size = 0x4, offset = 0, fixed_abs, tag = 'sflag constant byte address 0x0 - dummy sync flag']
  %s0 = inlined_call_operand.vmem [shape: f32[64,32], index: 0, kind: input, shape index: {}]
  %s1 = inlined_call_operand.vmem [shape: f32[64,32], index: 1, kind: output, shape index: {}]
  %s2 = sld [smem:[#allocation0]]
  $region36: #{tpu_custom_call.1} parent=0
    _
  %s4 = ssub.s32 1, %s2
  %s5 = scalar_select 0, %s4, %s2
  %p7 = scmp.lt.u32.totalorder 64, 8
  %p8 = pneg %p7
  // Predicated region
  $region2: #{tpu_custom_call.1} parent=0 // pred_check
    _
  $region3: #{tpu_custom_call.1} parent=0 // pred_check_branch
    %10 = sbr.rel (%p7) target = $region5
  $region4: #{tpu_custom_call.1} parent=0 // pred_region
    %s25 = sand.u32 64, 7
    %p26 = scmp.eq.s32.totalorder %s25, 0
    // Predicated region
    $region17: #{tpu_custom_call.1} parent=4 // pred_check
      %p27 = pneg %p26
    $region18: #{tpu_custom_call.1} parent=4 // pred_check_branch
      %29 = sbr.rel (%p27) target = $region20
    $region19: #{tpu_custom_call.1} parent=4 // pred_region
      loop: start=0, step=1, limit=1
      $region21: #{tpu_custom_call.1} parent=19 // loop_pre_header
        _
      $region22: #{tpu_custom_call.1} parent=19 // loop_header
        %s31 = sphi 0, %s35
        %p32 = scmp.ge.s32.totalorder %s31, 1
        %s36 = sphi %s0, %s0
        %s37 = sphi %s1, %s1
      $region23: #{tpu_custom_call.1} parent=19 // loop_header_branch
        %34 = sbr.rel (%p32) target = $region27
      $region24: #{tpu_custom_call.1} parent=19 // loop_body
        %v38 = vld [vmem:[%s36] sm:$0xff]
        %39 = vst [vmem:[%s37] sm:$0xff] %v38
        %v40 = vld [vmem:[%s36 + $0x8] sm:$0xff]
        %41 = vst [vmem:[%s37 + $0x8] sm:$0xff] %v40
        %v42 = vld [vmem:[%s36 + $0x10] sm:$0xff]
        %43 = vst [vmem:[%s37 + $0x10] sm:$0xff] %v42
        %v44 = vld [vmem:[%s36 + $0x18] sm:$0xff]
        %45 = vst [vmem:[%s37 + $0x18] sm:$0xff] %v44
        %v46 = vld [vmem:[%s36 + $0x20] sm:$0xff]
        %47 = vst [vmem:[%s37 + $0x20] sm:$0xff] %v46
        %v48 = vld [vmem:[%s36 + $0x28] sm:$0xff]
        %49 = vst [vmem:[%s37 + $0x28] sm:$0xff] %v48
        %v50 = vld [vmem:[%s36 + $0x30] sm:$0xff]
        %51 = vst [vmem:[%s37 + $0x30] sm:$0xff] %v50
        %v52 = vld [vmem:[%s36 + $0x38] sm:$0xff]
        %53 = vst [vmem:[%s37 + $0x38] sm:$0xff] %v52
      $region25: #{tpu_custom_call.1} parent=19 // loop_footer
        %s35 = sadd.s32 1, %s31
      $region26: #{tpu_custom_call.1} parent=19 // loop_footer_branch
        %30 = sbr.rel target = $region22
      $region27: #{tpu_custom_call.1} parent=19 // loop_exit
        _
    $region20: #{tpu_custom_call.1} parent=4 // pred_fallthru
      _
    %p54 = pneg %p26
    // Predicated region
    $region28: #{tpu_custom_call.1} parent=4 // pred_check
      _
    $region29: #{tpu_custom_call.1} parent=4 // pred_check_branch
      %56 = sbr.rel (%p26) target = $region31
    $region30: #{tpu_custom_call.1} parent=4 // pred_region
      %s57 = sand.u32 64, 7
    $region31: #{tpu_custom_call.1} parent=4 // pred_fallthru
      _
  $region5: #{tpu_custom_call.1} parent=0 // pred_fallthru
    _
  // Predicated region
  $region6: #{tpu_custom_call.1} parent=0 // pred_check
    %p11 = pneg %p7
  $region7: #{tpu_custom_call.1} parent=0 // pred_check_branch
    %13 = sbr.rel (%p11) target = $region9
  $region8: #{tpu_custom_call.1} parent=0 // pred_region
    %s14 = sshllo.u32 0, 64
    loop: start=0, step=1, limit=1
    $region10: #{tpu_custom_call.1} parent=8 // loop_pre_header
      _
    $region11: #{tpu_custom_call.1} parent=8 // loop_header
      %s16 = sphi 0, %s20
      %p17 = scmp.ge.s32.totalorder %s16, 1
      %s21 = sphi %s0, %s0
      %s22 = sphi %s1, %s1
    $region12: #{tpu_custom_call.1} parent=8 // loop_header_branch
      %19 = sbr.rel (%p17) target = $region16
    $region13: #{tpu_custom_call.1} parent=8 // loop_body
      %v23 = vld [vmem:[%s21] sm:%s14]
      %24 = vst [vmem:[%s22] sm:%s14] %v23
    $region14: #{tpu_custom_call.1} parent=8 // loop_footer
      %s20 = sadd.s32 1, %s16
    $region15: #{tpu_custom_call.1} parent=8 // loop_footer_branch
      %15 = sbr.rel target = $region11
    $region16: #{tpu_custom_call.1} parent=8 // loop_exit
      _
  $region9: #{tpu_custom_call.1} parent=0 // pred_fallthru
    _
  // Predicated region
  $region32: #{tpu_custom_call.1} parent=0 // pred_check
    _
  $region33: #{tpu_custom_call.1} parent=0 // pred_check_branch
    %60 = sbr.rel (0) target = $region35
  $region34: #{tpu_custom_call.1} parent=0 // pred_region
    %61 = vsyncadd [#allocation2], 1024
  $region35: #{tpu_custom_call.1} parent=0 // pred_fallthru
    _
  %s62 = smul.u32 64, 1
  %s63 = sshll.u32 %s62, 4
  %64 = dma.done [#allocation2], %s63
  %65 = vsyncmov [#allocation2]
  %s66 = vpop.sfrf %65
  %p67 = scmp.eq.s32.totalorder %s66, 0
  %p68 = pneg %p67
  %70 = shalt.err (%p68)

</llo_original>
